<compile_context>
chip_gen: v5e
topology: v5e:2x2
jax: 0.10.0
libtpu: 0.0.40
codegen_flags: <defaults>
</compile_context>

<pallas_src>
import jax
import jax.numpy as jnp
from jax import lax
from jax.experimental import pallas as pl
from jax.experimental.pallas import tpu as pltpu


# Contract the last dim of x (tm, tk) with the last dim of W (tn, tk) -> (tm, tn).
_NT_DIMS = (((1,), (1,)), ((), ()))


# ----------------------------- kernels ------------------------------------

def _linear_kernel_single_k(x_ref, w_ref, b_ref, o_ref):
    # x_ref: (tm, K), w_ref: (tn, K), b_ref: (1, tn), o_ref: (tm, tn)
    acc = lax.dot_general(x_ref[...], w_ref[...], dimension_numbers=_NT_DIMS,
                          preferred_element_type=jnp.float32)
    o_ref[...] = (acc + b_ref[...].astype(jnp.float32)).astype(o_ref.dtype)


def _linear_kernel_multi_k(x_ref, w_ref, b_ref, o_ref, acc_ref):
    # acc_ref: (tm, tn) f32 scratch resident across the K ("arbitrary") axis.
    k = pl.program_id(2)
    prod = lax.dot_general(x_ref[...], w_ref[...], dimension_numbers=_NT_DIMS,
                           preferred_element_type=jnp.float32)

    @pl.when(k == 0)
    def _():
        acc_ref[...] = prod            # fused zero-init + first accumulate

    @pl.when(k > 0)
    def _():
        acc_ref[...] += prod

    @pl.when(k == pl.num_programs(2) - 1)
    def _():
        o_ref[...] = (acc_ref[...] + b_ref[...].astype(jnp.float32)
                      ).astype(o_ref.dtype)


# ----------------------------- wrapper -------------------------------------

def _pick_tk(K, tk_max):
    """Largest multiple-of-128 tile <= tk_max that divides K (or K itself)."""
    if K <= tk_max:
        return K
    for cand in range(tk_max // 128, 0, -1):
        tk = cand * 128
        if K % tk == 0:
            return tk
    return None


def _step_vmem_bytes(tm, tn, tk, multi_k, in_isize, out_isize, b_isize):
    return (2 * tm * tk * in_isize          # x tile (double buffered)
            + 2 * tn * tk * in_isize        # W tile (double buffered)
            + 2 * tn * b_isize              # bias tile
            + 2 * tm * tn * out_isize       # output tile
            + (tm * tn * 4 if multi_k else 0))  # f32 accumulator scratch


def meta_linear(x, weight, bias, *, tm=512, tn=1024, tk=1024,
                compute_dtype=jnp.bfloat16,
                vmem_step_budget_bytes=28 * 1024 * 1024):
    """Pallas equivalent of F.linear(x, weight, bias).

    x: (..., K)     arbitrary leading dims, flattened to (M, K)
    weight: (N, K)  PyTorch nn.Linear convention (never transposed in HBM)
    bias: (N,)
    compute_dtype: MXU input dtype (default bf16); accumulation is always f32.
    returns: (..., N) in x.dtype
    """
    orig_shape = x.shape
    K = orig_shape[-1]
    N = weight.shape[0]
    assert weight.shape[1] == K, "weight must be (out_features, in_features)"
    assert bias.shape == (N,)

    out_dtype = x.dtype
    x2 = x.reshape(-1, K)
    M = x2.shape[0]

    cdtype = jnp.dtype(x.dtype if compute_dtype is None else compute_dtype)
    w = weight
    if x2.dtype != cdtype:
        x2 = x2.astype(cdtype)
    if w.dtype != cdtype:
        # NOTE: callers reusing `weight` across steps should pre-cast it once
        # to `compute_dtype` so this per-call HBM copy disappears.
        w = w.astype(cdtype)

    # ---------------- tile selection ----------------
    tm = min(tm, M)
    tn = min(tn, N)

    tk_sel = _pick_tk(K, tk)
    if tk_sel is None:
        # TODO(synk): rare case (K > tk with no multiple-of-128 divisor);
        # fall back to zero-padding the contraction axis.
        tk_sel = max(128, min(512, (tk // 128) * 128))
        K_pad = pl.cdiv(K, tk_sel) * tk_sel
        x2 = jnp.pad(x2, ((0, 0), (0, K_pad - K)))
        w = jnp.pad(w, ((0, 0), (0, K_pad - K)))
        K = K_pad
    tk = tk_sel

    # Megacore: if the whole problem fits one (tm, tn) tile, split N so a
    # "parallel" grid axis has >= 2 blocks (both v7x TensorCores get work).
    if M <= tm and N <= tn and N >= 256:
        tn = pl.cdiv(pl.cdiv(N, 2), 128) * 128

    nk = pl.cdiv(K, tk)
    multi_k = nk > 1

    in_isize = cdtype.itemsize
    out_isize = jnp.dtype(out_dtype).itemsize
    b_isize = jnp.dtype(bias.dtype).itemsize

    # Shrink tn (then tm) until the per-step footprint fits the budget
    # (~28 MiB default: safe on v7x's 64 MiB VMEM and on v5e with the raised
    # vmem limit below).  Shrunk tiles stay multiples of (8, 128).
    while (_step_vmem_bytes(tm, tn, tk, multi_k, in_isize, out_isize, b_isize)
           > vmem_step_budget_bytes):
        if tn > 128:
            tn = max(128, ((tn // 2) // 128) * 128)
        elif tm > 8 and M >= 8:
            tm = max(8, ((tm // 2) // 8) * 8)
        else:
            break

    nm, nn = pl.cdiv(M, tm), pl.cdiv(N, tn)
    b2 = bias.reshape(1, N)

    step_bytes = _step_vmem_bytes(tm, tn, tk, multi_k, in_isize, out_isize,
                                  b_isize)
    vmem_limit = int(min(60 * 2**20, max(32 * 2**20, step_bytes + 8 * 2**20)))

    # Actual streamed HBM traffic (inputs re-streamed per opposing tile).
    cost = pl.CostEstimate(
        flops=2 * M * K * N,
        transcendentals=0,
        bytes_accessed=(x2.size * in_isize * nn
                        + w.size * in_isize * nm
                        + b2.size * b_isize * nm
                        + M * N * out_isize),
    )

    if multi_k:
        grid = (nm, nn, nk)
        kernel = _linear_kernel_multi_k
        in_specs = [
            pl.BlockSpec((tm, tk), lambda i, j, k: (i, k)),   # x tile
            pl.BlockSpec((tn, tk), lambda i, j, k: (j, k)),   # W (N, K) tile, NT dot
            pl.BlockSpec((1, tn), lambda i, j, k: (0, j)),    # bias tile
        ]
        out_specs = pl.BlockSpec((tm, tn), lambda i, j, k: (i, j))
        scratch_shapes = [pltpu.VMEM((tm, tn), jnp.float32)]
        dim_sem = ("parallel", "parallel", "arbitrary")
    else:
        # Single K step: no accumulator scratch, no zero-init, direct store.
        grid = (nm, nn)
        kernel = _linear_kernel_single_k
        in_specs = [
            pl.BlockSpec((tm, tk), lambda i, j: (i, 0)),
            pl.BlockSpec((tn, tk), lambda i, j: (j, 0)),
            pl.BlockSpec((1, tn), lambda i, j: (0, j)),
        ]
        out_specs = pl.BlockSpec((tm, tn), lambda i, j: (i, j))
        scratch_shapes = []
        dim_sem = ("parallel", "parallel")

    out = pl.pallas_call(
        kernel,
        out_shape=jax.ShapeDtypeStruct((M, N), out_dtype),
        grid_spec=pltpu.PrefetchScalarGridSpec(
            num_scalar_prefetch=0,
            grid=grid,
            in_specs=in_specs,
            out_specs=out_specs,
            scratch_shapes=scratch_shapes,
        ),
        compiler_params=pltpu.CompilerParams(
            dimension_semantics=dim_sem,
            vmem_limit_bytes=vmem_limit,
        ),
        cost_estimate=cost,
    )(x2, w, b2)

    return out.reshape(*orig_shape[:-1], N)


def init_meta_linear_params(key, in_features, out_features, dtype=jnp.float32):
    """Deterministic init mirroring nn.Linear's default (uniform +/- 1/sqrt(in))."""
    kw, kb = jax.random.split(key)
    bound = 1.0 / (in_features ** 0.5)
    weight = jax.random.uniform(
        kw, (out_features, in_features), dtype, minval=-bound, maxval=bound)
    bias = jax.random.uniform(
        kb, (out_features,), dtype, minval=-bound, maxval=bound)
    return weight, bias


if __name__ == "__main__":
    key = jax.random.PRNGKey(0)
    k_x, k_p, k_x2, k_p2, k_x3, k_p3 = jax.random.split(key, 6)

    # --- Test 1: module-typical small shape, default bf16 MXU compute -----
    batch, in_features, out_features = 16, 32, 128
    x = jax.random.normal(k_x, (batch, in_features), jnp.float32)
    weight, bias = init_meta_linear_params(k_p, in_features, out_features)

    y = jax.block_until_ready(meta_linear(x, weight, bias))
    y_ref = (x.astype(jnp.bfloat16).astype(jnp.float32)
             @ weight.astype(jnp.bfloat16).astype(jnp.float32).T) + bias
    assert y.shape == (batch, out_features)
    assert jnp.allclose(y, y_ref, atol=1e-2, rtol=1e-2), "mismatch vs reference (1)"

    # --- Test 2: full 3-D tiled path (ragged M, tiled N & K), f32 compute --
    M2, K2, N2 = 40, 256, 384
    xb = jax.random.normal(k_x2, (M2, K2), jnp.float32)
    wb, bb = init_meta_linear_params(k_p2, K2, N2)
    yb = jax.block_until_ready(
        meta_linear(xb, wb, bb, tm=16, tn=128, tk=128,
                    compute_dtype=jnp.float32))          # grid = (3, 3, 2)
    yb_ref = xb @ wb.T + bb
    assert yb.shape == (M2, N2)
    assert jnp.allclose(yb, yb_ref, atol=1e-4, rtol=1e-4), "mismatch vs reference (2)"

    # --- Test 3: 3-D activations + megacore N-split path, default bf16 ----
    B3, S3, H3, O3 = 2, 8, 32, 256
    xc = jax.random.normal(k_x3, (B3, S3, H3), jnp.float32)
    wc, bc = init_meta_linear_params(k_p3, H3, O3)
    yc = jax.block_until_ready(meta_linear(xc, wc, bc))   # grid = (1, 2)
    yc_ref = (xc.astype(jnp.bfloat16).astype(jnp.float32)
              @ wc.astype(jnp.bfloat16).astype(jnp.float32).T) + bc
    assert yc.shape == (B3, S3, O3)
    assert jnp.allclose(yc, yc_ref, atol=1e-2, rtol=1e-2), "mismatch vs reference (3)"

    print("KERNEL_OK")
</pallas_src>

<mosaic_0001>
module attributes {stable_mosaic.version = 11 : i64} {
  func.func @_linear_kernel_single_k(%arg0: i32, %arg1: i32, %arg2: memref<16x32xbf16, #tpu.memory_space<vmem>>, %arg3: memref<128x32xbf16, #tpu.memory_space<vmem>>, %arg4: memref<1x128xf32, #tpu.memory_space<vmem>>, %arg5: memref<16x128xf32, #tpu.memory_space<vmem>>) attributes {dimension_semantics = [#tpu.dimension_semantics<parallel>, #tpu.dimension_semantics<parallel>], iteration_bounds = array<i64: 1, 1>, scalar_prefetch = 0 : i64, scratch_operands = 0 : i64, tpu.core_type = #tpu.core_type<tc>, window_params = [{transform_indices = @transform_0, window_bounds = array<i64: 16, 32>}, {transform_indices = @transform_1, window_bounds = array<i64: 128, 32>}, {transform_indices = @transform_2, window_bounds = array<i64: 1, 128>}, {transform_indices = @transform_3, window_bounds = array<i64: 16, 128>}]} {
    %c0 = arith.constant 0 : index
    %c0_0 = arith.constant 0 : index
    %0 = vector.load %arg2[%c0, %c0_0] : memref<16x32xbf16, #tpu.memory_space<vmem>>, vector<16x32xbf16>
    %c0_1 = arith.constant 0 : index
    %c0_2 = arith.constant 0 : index
    %1 = vector.load %arg3[%c0_1, %c0_2] : memref<128x32xbf16, #tpu.memory_space<vmem>>, vector<128x32xbf16>
    %cst = arith.constant dense<0.000000e+00> : vector<16x128xf32>
    %2 = tpu.matmul %0, %1, %cst {dimension_numbers = #tpu.dot_dimension_numbers<[1], [1], [0], [0], [0, 0, 1, 0], [], []>} : vector<16x32xbf16>, vector<128x32xbf16>, vector<16x128xf32> -> vector<16x128xf32>
    %c0_3 = arith.constant 0 : index
    %c0_4 = arith.constant 0 : index
    %3 = vector.load %arg4[%c0_3, %c0_4] : memref<1x128xf32, #tpu.memory_space<vmem>>, vector<1x128xf32>
    %4 = vector.broadcast %3 : vector<1x128xf32> to vector<16x128xf32>
    %5 = arith.addf %2, %4 : vector<16x128xf32>
    %c0_5 = arith.constant 0 : index
    %c0_6 = arith.constant 0 : index
    %6 = vector.load %arg5[%c0_5, %c0_6] : memref<16x128xf32, #tpu.memory_space<vmem>>, vector<16x128xf32>
    tpu.vector_store %arg5[%c0_5, %c0_6], %5 {strides = array<i32>} : memref<16x128xf32, #tpu.memory_space<vmem>>, vector<16x128xf32>,
    return
  }
  func.func @transform_0(%arg0: i32, %arg1: i32) -> (i32, i32) {
    %c0_i32 = arith.constant 0 : i32
    %c0_i32_0 = arith.constant 0 : i32
    return %arg0, %c0_i32 : i32, i32
  }
  func.func @transform_1(%arg0: i32, %arg1: i32) -> (i32, i32) {
    %c0_i32 = arith.constant 0 : i32
    %c0_i32_0 = arith.constant 0 : i32
    return %arg1, %c0_i32 : i32, i32
  }
  func.func @transform_2(%arg0: i32, %arg1: i32) -> (i32, i32) {
    %c0_i32 = arith.constant 0 : i32
    %c0_i32_0 = arith.constant 0 : i32
    return %c0_i32, %arg1 : i32, i32
  }
  func.func @transform_3(%arg0: i32, %arg1: i32) -> (i32, i32) {
    %c0_i32 = arith.constant 0 : i32
    return %arg0, %arg1 : i32, i32
  }
}

</mosaic_0001>

<llo_original>
// kernel: tpu_custom_call.1
$region0: #{tpu_custom_call.1}
  #allocation0 [shape = 'u32[]', space=smem, size = 0x4, offset = 0x4, fixed_abs, tag = 'smem constant byte address 0x4 - core index']
  #allocation1 [shape = 'u32[72,128]{1,0:T(1,128)}', space=vmem, size = 0x9000, scoped, tag = 'internal scratch']
  %s0 = inlined_call_operand.vmem [shape: bf16[16,32], index: 0, kind: input, shape index: {}]
  %s1 = inlined_call_operand.vmem [shape: bf16[128,32], index: 1, kind: input, shape index: {}]
  %s2 = inlined_call_operand.vmem [shape: f32[1,128], index: 2, kind: input, shape index: {}]
  %s3 = inlined_call_operand.hbm [shape: f32[16,128], index: 3, kind: output, shape index: {}]
  %s4 = sld [smem:[#allocation0]]
  $region22: #{tpu_custom_call.1} parent=0
    _
  %s6 = ssub.s32 1, %s4
  %s7 = scalar_select 0, %s6, %s4
  $region1: #{tpu_custom_call.1} parent=0
    #allocation2 [shape = 'u8[8192]{0}', space=vmem, size = 0x2000, scoped, tag = 'output window, operand 0, single buffered']
    #allocation3 [shape = 's32[1]{0}', space=sflag, size = 0x4, scoped, tag = 'scoped memory for tpu_custom_call.1']
    %8 = vsyncpa [#allocation3], 0
    // Predicated region
    $region2: #{tpu_custom_call.1} parent=1 // pred_check
      _
    $region3: #{tpu_custom_call.1} parent=1 // pred_check_branch
      %10 = sbr.rel (0) target = $region5
    $region4: #{tpu_custom_call.1} parent=1 // pred_region
      _
    $region5: #{tpu_custom_call.1} parent=1 // pred_fallthru
      _
    // Predicated region
    $region6: #{tpu_custom_call.1} parent=1 // pred_check
      _
    $region7: #{tpu_custom_call.1} parent=1 // pred_check_branch
      %12 = sbr.rel (0) target = $region9
    $region8: #{tpu_custom_call.1} parent=1 // pred_region
      _
    $region9: #{tpu_custom_call.1} parent=1 // pred_fallthru
      _
    // Predicated region
    $region10: #{tpu_custom_call.1} parent=1 // pred_check
      _
    $region11: #{tpu_custom_call.1} parent=1 // pred_check_branch
      %14 = sbr.rel (0) target = $region13
    $region12: #{tpu_custom_call.1} parent=1 // pred_region
      _
    $region13: #{tpu_custom_call.1} parent=1 // pred_fallthru
      _
    %v15 = vld [vmem:[%s0] sm:$0xf]
    %v16 = vld [vmem:[%s0 + $0x4] sm:$0xf]
    %v17 = vld [vmem:[%s1] sm:$0xf]
    %v18 = vld [vmem:[%s1 + $0x4] sm:$0xf]
    %v19 = vld [vmem:[%s1 + $0x8] sm:$0xf]
    %v20 = vld [vmem:[%s1 + $0xc] sm:$0xf]
    %v21 = vld [vmem:[%s1 + $0x10] sm:$0xf]
    %v22 = vld [vmem:[%s1 + $0x14] sm:$0xf]
    %v23 = vld [vmem:[%s1 + $0x18] sm:$0xf]
    %v24 = vld [vmem:[%s1 + $0x1c] sm:$0xf]
    %v25 = vld [vmem:[%s1 + $0x20] sm:$0xf]
    %v26 = vld [vmem:[%s1 + $0x24] sm:$0xf]
    %v27 = vld [vmem:[%s1 + $0x28] sm:$0xf]
    %v28 = vld [vmem:[%s1 + $0x2c] sm:$0xf]
    %v29 = vld [vmem:[%s1 + $0x30] sm:$0xf]
    %v30 = vld [vmem:[%s1 + $0x34] sm:$0xf]
    %v31 = vld [vmem:[%s1 + $0x38] sm:$0xf]
    %v32 = vld [vmem:[%s1 + $0x3c] sm:$0xf]
    %v33 = vld [vmem:[%s2] sm:$0x1]
    %v35 = vperm.slane %v33, 0
    %v39 = vunpack.c.l.b16 %v15
    %v40 = vunpack.c.l.b16 %v16
    %v41 = vpack.c.b16 %v40, %v39
    %v58 = vunpack.c.l.b16 %v17
    %v59 = vunpack.c.l.b16 %v18
    %v60 = vunpack.c.l.b16 %v19
    %v61 = vunpack.c.l.b16 %v20
    %v62 = vunpack.c.l.b16 %v21
    %v63 = vunpack.c.l.b16 %v22
    %v64 = vunpack.c.l.b16 %v23
    %v65 = vunpack.c.l.b16 %v24
    %v66 = vunpack.c.l.b16 %v25
    %v67 = vunpack.c.l.b16 %v26
    %v68 = vunpack.c.l.b16 %v27
    %v69 = vunpack.c.l.b16 %v28
    %v70 = vunpack.c.l.b16 %v29
    %v71 = vunpack.c.l.b16 %v30
    %v72 = vunpack.c.l.b16 %v31
    %v73 = vunpack.c.l.b16 %v32
    %v74 = vpack.c.b16 %v59, %v58
    %v75 = vpack.c.b16 %v61, %v60
    %v76 = vpack.c.b16 %v63, %v62
    %v77 = vpack.c.b16 %v65, %v64
    %v78 = vpack.c.b16 %v67, %v66
    %v79 = vpack.c.b16 %v69, %v68
    %v80 = vpack.c.b16 %v71, %v70
    %v81 = vpack.c.b16 %v73, %v72
    %vm82 = vcmask 261120
    %v84 = vsel %vm82, %v41, 0
    %v87 = vsel %vm82, %v74, 0
    %v90 = vsel %vm82, %v75, 0
    %v93 = vsel %vm82, %v76, 0
    %v96 = vsel %vm82, %v77, 0
    %v99 = vsel %vm82, %v78, 0
    %v102 = vsel %vm82, %v79, 0
    %v105 = vsel %vm82, %v80, 0
    %v108 = vsel %vm82, %v81, 0
    %110 = vmatpush.bf16.xpose.msra.mxu0 %v108
    %111 = vmatpush.bf16.xpose.msra.mxu0 %v105
    %112 = vmatpush.bf16.xpose.msra.mxu0 %v102
    %113 = vmatpush.bf16.xpose.msra.mxu0 %v99
    %114 = vmatpush.bf16.xpose.msra.mxu0 %v96
    %115 = vmatpush.bf16.xpose.msra.mxu0 %v93
    %116 = vmatpush.bf16.xpose.msra.mxu0 %v90
    %117 = vmatpush.bf16.xpose.msra.mxu0 %v87
    %118 = vmatmul.bf16.gmra.mxu0 %v84
    %v119 = vpop.f32.mrf.mxu0
    %v120 = vadd.f32 %v35, %v119
    %v121 = vpop.f32.mrf.mxu0
    %v122 = vadd.f32 %v35, %v121
    %123 = vdwg.mxu0
    %124 = vst [vmem:[#allocation2] sm:$0xff] %v120
    %125 = vst [vmem:[#allocation2 + $0x8] sm:$0xff] %v122
    // Predicated region
    $region14: #{tpu_custom_call.1} parent=1 // pred_check
      _
    $region15: #{tpu_custom_call.1} parent=1 // pred_check_branch
      %127 = sbr.rel (0) target = $region17
    $region16: #{tpu_custom_call.1} parent=1 // pred_region
      %129 = vsyncadd [#allocation3], 0
      %s130 = sshll.u32 [#allocation2], 4
      %s131 = int_to_ptr.vmem [resolvable:$true] %s130
      %s132 = sshll.u32 %s3, 4
      %s133 = int_to_ptr.hbm [resolvable:$true] %s132
      %138 = dma.vmem_to_hbm [thread:$0]  %s131, 256, %s133, [#allocation3], 128, 128, 8
    $region17: #{tpu_custom_call.1} parent=1 // pred_fallthru
      _
    // Predicated region
    $region18: #{tpu_custom_call.1} parent=1 // pred_check
      _
    $region19: #{tpu_custom_call.1} parent=1 // pred_check_branch
      %140 = sbr.rel (0) target = $region21
    $region20: #{tpu_custom_call.1} parent=1 // pred_region
      %142 = dma.done [#allocation3], 256
    $region21: #{tpu_custom_call.1} parent=1 // pred_fallthru
      _
    %143 = vsyncpa [#allocation3], 1

</llo_original>
